<compile_context>
chip_gen: v6e
topology: v6e:2x2x1
jax: 0.10.0
libtpu: 0.0.40
codegen_flags: <defaults>
</compile_context>

<pallas_src>
import jax
import jax.numpy as jnp
from jax.experimental import pallas as pl
from jax.experimental.pallas import tpu as pltpu

NUM_POS = 17
NUM_NER = 9
HIDDEN = 768
NUM_CLS_PAD = 128          # fused / lane-dense class axis
TILE_N_MAX = 1024          # rows per grid step (well under 32 MiB scoped VMEM)


def _round_up(x, m):
    return ((x + m - 1) // m) * m


def _heads_loss_kernel(h_ref, w_ref, b_ref, lab_ref, logits_ref, part_ref):
    """One N-tile: fused-head matmul, lane-dense logits store, partial loss sums.

    h_ref      : [T, 768]    bf16  hidden states (post-dropout)
    w_ref      : [768, 128]  bf16  fused head weight (POS 0:17, NER 17:26, pad 0)
    b_ref      : [1, 128]    f32   fused head bias
    lab_ref    : [T, 8]      i32   col 0 = POS label, 1 = NER label, 2 = mask
    logits_ref : [T, 128]    f32   out: fused logits
    part_ref   : [1, 8, 128] f32   out: lane 0 = sum nll_pos, 1 = sum nll_ner,
                                        2 = active count (sublane 0)
    """
    logits = jnp.dot(h_ref[...], w_ref[...],
                     preferred_element_type=jnp.float32) + b_ref[...]
    logits_ref[...] = logits                                   # unmasked 128-lane store

    tpos = lab_ref[:, 0:1]
    tner = lab_ref[:, 1:2]
    active = lab_ref[:, 2:3].astype(jnp.float32)               # [T, 1]

    def _masked_nll_sum(lg, labels):
        # `lg` is a static slice of the padded logits, so padded classes never
        # enter the log-sum-exp.
        m = jnp.max(lg, axis=-1, keepdims=True)
        lse = jnp.log(jnp.sum(jnp.exp(lg - m), axis=-1, keepdims=True)) + m
        cls = jax.lax.broadcasted_iota(jnp.int32, lg.shape, 1)
        picked = jnp.sum(jnp.where(cls == labels, lg, 0.0),
                         axis=-1, keepdims=True)
        return jnp.sum((lse - picked) * active)

    s_pos = _masked_nll_sum(logits[:, :NUM_POS], tpos)
    s_ner = _masked_nll_sum(logits[:, NUM_POS:NUM_POS + NUM_NER], tner)
    cnt = jnp.sum(active)

    lane = jax.lax.broadcasted_iota(jnp.int32, (8, NUM_CLS_PAD), 1)
    part = jnp.where(lane == 0, s_pos,
           jnp.where(lane == 1, s_ner,
           jnp.where(lane == 2, cnt, 0.0)))
    part_ref[...] = part[None]


def ner_pos_forward(hidden, w_pos, b_pos, w_ner, b_ner,
                    mask, target_pos, target_ner):
    """hidden: [B, S, 768] f32; mask/target_pos/target_ner: [B, S] int."""
    B, S, H = hidden.shape
    N = B * S

    tile_n = max(16, min(TILE_N_MAX, _round_up(N, 16)))
    n_pad = _round_up(N, tile_n)
    num_tiles = n_pad // tile_n

    # bf16 hidden states halve the dominant HBM read; dot accumulates in f32.
    h = hidden.reshape(N, H).astype(jnp.bfloat16)
    if n_pad != N:
        h = jnp.pad(h, ((0, n_pad - N), (0, 0)))

    # Fused head parameters: [768, 128] with POS in lanes 0:17, NER in 17:26.
    w_fused = jnp.zeros((H, NUM_CLS_PAD), jnp.float32)
    w_fused = w_fused.at[:, :NUM_POS].set(w_pos)
    w_fused = w_fused.at[:, NUM_POS:NUM_POS + NUM_NER].set(w_ner)
    w_fused = w_fused.astype(jnp.bfloat16)
    b_fused = jnp.zeros((1, NUM_CLS_PAD), jnp.float32)
    b_fused = b_fused.at[0, :NUM_POS].set(b_pos)
    b_fused = b_fused.at[0, NUM_POS:NUM_POS + NUM_NER].set(b_ner)

    # Packed labels/mask: col 0 = POS, 1 = NER, 2 = mask. Padded rows -> mask 0.
    lab = jnp.stack([target_pos.reshape(-1).astype(jnp.int32),
                     target_ner.reshape(-1).astype(jnp.int32),
                     mask.reshape(-1).astype(jnp.int32)], axis=1)
    lab = jnp.pad(lab, ((0, n_pad - N), (0, 8 - lab.shape[1])))

    grid_spec = pltpu.PrefetchScalarGridSpec(
        num_scalar_prefetch=0,
        grid=(num_tiles,),
        in_specs=[
            pl.BlockSpec((tile_n, H), lambda i: (i, 0)),             # h tile
            pl.BlockSpec((H, NUM_CLS_PAD), lambda i: (0, 0)),        # resident W
            pl.BlockSpec((1, NUM_CLS_PAD), lambda i: (0, 0)),        # resident b
            pl.BlockSpec((tile_n, 8), lambda i: (i, 0)),             # labels/mask
        ],
        out_specs=(
            pl.BlockSpec((tile_n, NUM_CLS_PAD), lambda i: (i, 0)),   # fused logits
            pl.BlockSpec((1, 8, NUM_CLS_PAD), lambda i: (i, 0, 0)),  # partials
        ),
    )

    out_shapes = (
        jax.ShapeDtypeStruct((n_pad, NUM_CLS_PAD), jnp.float32),
        jax.ShapeDtypeStruct((num_tiles, 8, NUM_CLS_PAD), jnp.float32),
    )

    bytes_accessed = (h.size * 2 + w_fused.size * 2 + b_fused.size * 4
                      + lab.size * 4 + n_pad * NUM_CLS_PAD * 4
                      + num_tiles * 8 * NUM_CLS_PAD * 4)
    cost = pl.CostEstimate(
        flops=2 * n_pad * H * NUM_CLS_PAD,
        transcendentals=n_pad * (NUM_POS + NUM_NER),
        bytes_accessed=bytes_accessed)

    logits, partial = pl.pallas_call(
        _heads_loss_kernel,
        out_shape=out_shapes,
        grid_spec=grid_spec,
        compiler_params=pltpu.CompilerParams(
            dimension_semantics=("parallel",),
            vmem_limit_bytes=32 * 1024 * 1024),
        cost_estimate=cost,
    )(h, w_fused, b_fused, lab)

    pos_logits = logits[:N, :NUM_POS].reshape(B, S, NUM_POS)
    ner_logits = logits[:N, NUM_POS:NUM_POS + NUM_NER].reshape(B, S, NUM_NER)

    sum_pos = jnp.sum(partial[:, 0, 0])
    sum_ner = jnp.sum(partial[:, 0, 1])
    count = jnp.sum(partial[:, 0, 2])
    # Mean over active tokens (CrossEntropyLoss ignore_index semantics); guard
    # count == 0 so an all-masked batch yields 0 instead of NaN.
    loss = jnp.where(count > 0.0, (sum_pos + sum_ner) / (2.0 * count), 0.0)
    return pos_logits, ner_logits, loss


def _reference(hidden, w_pos, b_pos, w_ner, b_ner, mask, tpos, tner):
    B, S, H = hidden.shape
    # Mirror the kernel's bf16 input cast; accumulate in f32.
    h = hidden.reshape(-1, H).astype(jnp.bfloat16).astype(jnp.float32)
    wp = w_pos.astype(jnp.bfloat16).astype(jnp.float32)
    wn = w_ner.astype(jnp.bfloat16).astype(jnp.float32)
    pos = jnp.dot(h, wp, precision=jax.lax.Precision.HIGHEST) + b_pos
    ner = jnp.dot(h, wn, precision=jax.lax.Precision.HIGHEST) + b_ner

    def ce(logits, labels, active):
        logp = jax.nn.log_softmax(logits, axis=-1)
        nll = -jnp.take_along_axis(logp, labels[:, None], axis=-1)[:, 0]
        return jnp.sum(nll * active) / jnp.sum(active)

    active = (mask.reshape(-1) == 1).astype(jnp.float32)
    loss = (ce(pos, tpos.reshape(-1), active)
            + ce(ner, tner.reshape(-1), active)) / 2
    return pos.reshape(B, S, -1), ner.reshape(B, S, -1), loss


if __name__ == "__main__":
    B, S = 2, 8
    VOCAB = 128

    key = jax.random.PRNGKey(0)
    k_emb, k_ids, k_wp, k_bp, k_wn, k_bn, k_tp, k_tn = jax.random.split(key, 8)

    # ---- synthetic frozen backbone (stand-in for xlm-roberta-base) ----
    embed_table = jax.random.normal(k_emb, (VOCAB, HIDDEN), jnp.float32) * 0.02
    ids = jax.random.randint(k_ids, (B, S), 0, VOCAB, dtype=jnp.int32)
    hidden = embed_table[ids]                    # [B, S, 768] "last_hidden_state"

    # attention mask with some padding to exercise ignore_index masking
    lengths = jnp.array([8, 5], dtype=jnp.int32)
    mask = (jnp.arange(S)[None, :] < lengths[:, None]).astype(jnp.int32)

    # ---- deterministic head parameters (nn.Linear(768, C)) ----
    w_pos = jax.random.normal(k_wp, (HIDDEN, NUM_POS), jnp.float32) * 0.02
    b_pos = jax.random.normal(k_bp, (NUM_POS,), jnp.float32) * 0.02
    w_ner = jax.random.normal(k_wn, (HIDDEN, NUM_NER), jnp.float32) * 0.02
    b_ner = jax.random.normal(k_bn, (NUM_NER,), jnp.float32) * 0.02

    target_pos = jax.random.randint(k_tp, (B, S), 0, NUM_POS, dtype=jnp.int32)
    target_ner = jax.random.randint(k_tn, (B, S), 0, NUM_NER, dtype=jnp.int32)

    pos_logits, ner_logits, loss = ner_pos_forward(
        hidden, w_pos, b_pos, w_ner, b_ner, mask, target_pos, target_ner)
    jax.block_until_ready((pos_logits, ner_logits, loss))

    ref_pos, ref_ner, ref_loss = _reference(
        hidden, w_pos, b_pos, w_ner, b_ner, mask, target_pos, target_ner)

    assert jnp.allclose(pos_logits, ref_pos, atol=1e-4, rtol=1e-3)
    assert jnp.allclose(ner_logits, ref_ner, atol=1e-4, rtol=1e-3)
    assert jnp.allclose(loss, ref_loss, atol=1e-4, rtol=1e-4)

    print("KERNEL_OK")
</pallas_src>

<mosaic_0001>
module attributes {stable_mosaic.version = 11 : i64} {
  func.func @_heads_loss_kernel(%arg0: i32, %arg1: memref<16x768xbf16, #tpu.memory_space<vmem>>, %arg2: memref<768x128xbf16, #tpu.memory_space<vmem>>, %arg3: memref<1x128xf32, #tpu.memory_space<vmem>>, %arg4: memref<16x8xi32, #tpu.memory_space<vmem>>, %arg5: memref<16x128xf32, #tpu.memory_space<vmem>>, %arg6: memref<1x8x128xf32, #tpu.memory_space<vmem>>) attributes {dimension_semantics = [#tpu.dimension_semantics<parallel>], iteration_bounds = array<i64: 1>, scalar_prefetch = 0 : i64, scratch_operands = 0 : i64, tpu.core_type = #tpu.core_type<tc>, window_params = [{transform_indices = @transform_0, window_bounds = array<i64: 16, 768>}, {pipeline_mode = #tpu.pipeline_mode<synchronous>, transform_indices = @transform_1, window_bounds = array<i64: 768, 128>}, {pipeline_mode = #tpu.pipeline_mode<synchronous>, transform_indices = @transform_2, window_bounds = array<i64: 1, 128>}, {transform_indices = @transform_3, window_bounds = array<i64: 16, 8>}, {transform_indices = @transform_4, window_bounds = array<i64: 16, 128>}, {transform_indices = @transform_5, window_bounds = array<i64: 1, 8, 128>}]} {
    %c0 = arith.constant 0 : index
    %c0_0 = arith.constant 0 : index
    %0 = vector.load %arg1[%c0, %c0_0] : memref<16x768xbf16, #tpu.memory_space<vmem>>, vector<16x768xbf16>
    %c0_1 = arith.constant 0 : index
    %c0_2 = arith.constant 0 : index
    %1 = vector.load %arg2[%c0_1, %c0_2] : memref<768x128xbf16, #tpu.memory_space<vmem>>, vector<768x128xbf16>
    %cst = arith.constant dense<0.000000e+00> : vector<16x128xf32>
    %2 = tpu.matmul %0, %1, %cst {dimension_numbers = #tpu.dot_dimension_numbers<[1], [0], [0], [1], [0, 0, 1, 1], [], []>} : vector<16x768xbf16>, vector<768x128xbf16>, vector<16x128xf32> -> vector<16x128xf32>
    %c0_3 = arith.constant 0 : index
    %c0_4 = arith.constant 0 : index
    %3 = vector.load %arg3[%c0_3, %c0_4] : memref<1x128xf32, #tpu.memory_space<vmem>>, vector<1x128xf32>
    %4 = vector.broadcast %3 : vector<1x128xf32> to vector<16x128xf32>
    %5 = arith.addf %2, %4 : vector<16x128xf32>
    %c0_5 = arith.constant 0 : index
    %c0_6 = arith.constant 0 : index
    %6 = vector.load %arg5[%c0_5, %c0_6] : memref<16x128xf32, #tpu.memory_space<vmem>>, vector<16x128xf32>
    tpu.vector_store %arg5[%c0_5, %c0_6], %5 {strides = array<i32>} : memref<16x128xf32, #tpu.memory_space<vmem>>, vector<16x128xf32>,
    %c0_7 = arith.constant 0 : index
    %c0_8 = arith.constant 0 : index
    %7 = vector.load %arg4[%c0_7, %c0_8] : memref<16x8xi32, #tpu.memory_space<vmem>>, vector<16x1xi32>
    %c0_9 = arith.constant 0 : index
    %c1 = arith.constant 1 : index
    %8 = vector.load %arg4[%c0_9, %c1] : memref<16x8xi32, #tpu.memory_space<vmem>>, vector<16x1xi32>
    %c0_10 = arith.constant 0 : index
    %c2 = arith.constant 2 : index
    %9 = vector.load %arg4[%c0_10, %c2] : memref<16x8xi32, #tpu.memory_space<vmem>>, vector<16x1xi32>
    %10 = arith.sitofp %9 : vector<16x1xi32> to vector<16x1xf32>
    %11 = vector.extract_strided_slice %5 {offsets = [0, 0], sizes = [16, 17], strides = [1, 1]} : vector<16x128xf32> to vector<16x17xf32>
    %cst_11 = arith.constant dense<0xFF800000> : vector<16xf32>
    %12 = vector.multi_reduction <maximumf>, %11, %cst_11 [1] : vector<16x17xf32> to vector<16xf32>
    %13 = vector.shape_cast %12 : vector<16xf32> to vector<16x1xf32>
    %14 = vector.broadcast %13 : vector<16x1xf32> to vector<16x17xf32>
    %15 = arith.subf %11, %14 : vector<16x17xf32>
    %16 = math.exp %15 : vector<16x17xf32>
    %cst_12 = arith.constant dense<0.000000e+00> : vector<16xf32>
    %17 = vector.multi_reduction <add>, %16, %cst_12 [1] : vector<16x17xf32> to vector<16xf32>
    %18 = vector.shape_cast %17 : vector<16xf32> to vector<16x1xf32>
    %19 = math.log %18 : vector<16x1xf32>
    %20 = arith.addf %19, %13 : vector<16x1xf32>
    %21 = tpu.iota {dimensions = array<i32: 1>} : vector<16x17xi32>
    %22 = vector.broadcast %7 : vector<16x1xi32> to vector<16x17xi32>
    %23 = arith.cmpi eq, %21, %22 : vector<16x17xi32>
    %cst_13 = arith.constant 0.000000e+00 : f32
    %24 = vector.broadcast %cst_13 : f32 to vector<16x17xf32>
    %25 = arith.select %23, %11, %24 : vector<16x17xi1>, vector<16x17xf32>
    %cst_14 = arith.constant dense<0.000000e+00> : vector<16xf32>
    %26 = vector.multi_reduction <add>, %25, %cst_14 [1] : vector<16x17xf32> to vector<16xf32>
    %27 = vector.shape_cast %26 : vector<16xf32> to vector<16x1xf32>
    %28 = arith.subf %20, %27 : vector<16x1xf32>
    %29 = arith.mulf %28, %10 : vector<16x1xf32>
    %30 = vector.shape_cast %29 : vector<16x1xf32> to vector<1x16x1xf32>
    %cst_15 = arith.constant dense<0.000000e+00> : vector<1xf32>
    %31 = vector.multi_reduction <add>, %30, %cst_15 [1, 2] : vector<1x16x1xf32> to vector<1xf32>
    %32 = vector.shape_cast %31 : vector<1xf32> to vector<1x1x1xf32>
    %33 = vector.extract %32[0, 0, 0] : f32 from vector<1x1x1xf32>
    %34 = vector.extract_strided_slice %5 {offsets = [0, 17], sizes = [16, 9], strides = [1, 1]} : vector<16x128xf32> to vector<16x9xf32>
    %cst_16 = arith.constant dense<0xFF800000> : vector<16xf32>
    %35 = vector.multi_reduction <maximumf>, %34, %cst_16 [1] : vector<16x9xf32> to vector<16xf32>
    %36 = vector.shape_cast %35 : vector<16xf32> to vector<16x1xf32>
    %37 = vector.broadcast %36 : vector<16x1xf32> to vector<16x9xf32>
    %38 = arith.subf %34, %37 : vector<16x9xf32>
    %39 = math.exp %38 : vector<16x9xf32>
    %cst_17 = arith.constant dense<0.000000e+00> : vector<16xf32>
    %40 = vector.multi_reduction <add>, %39, %cst_17 [1] : vector<16x9xf32> to vector<16xf32>
    %41 = vector.shape_cast %40 : vector<16xf32> to vector<16x1xf32>
    %42 = math.log %41 : vector<16x1xf32>
    %43 = arith.addf %42, %36 : vector<16x1xf32>
    %44 = tpu.iota {dimensions = array<i32: 1>} : vector<16x9xi32>
    %45 = vector.broadcast %8 : vector<16x1xi32> to vector<16x9xi32>
    %46 = arith.cmpi eq, %44, %45 : vector<16x9xi32>
    %cst_18 = arith.constant 0.000000e+00 : f32
    %47 = vector.broadcast %cst_18 : f32 to vector<16x9xf32>
    %48 = arith.select %46, %34, %47 : vector<16x9xi1>, vector<16x9xf32>
    %cst_19 = arith.constant dense<0.000000e+00> : vector<16xf32>
    %49 = vector.multi_reduction <add>, %48, %cst_19 [1] : vector<16x9xf32> to vector<16xf32>
    %50 = vector.shape_cast %49 : vector<16xf32> to vector<16x1xf32>
    %51 = arith.subf %43, %50 : vector<16x1xf32>
    %52 = arith.mulf %51, %10 : vector<16x1xf32>
    %53 = vector.shape_cast %52 : vector<16x1xf32> to vector<1x16x1xf32>
    %cst_20 = arith.constant dense<0.000000e+00> : vector<1xf32>
    %54 = vector.multi_reduction <add>, %53, %cst_20 [1, 2] : vector<1x16x1xf32> to vector<1xf32>
    %55 = vector.shape_cast %54 : vector<1xf32> to vector<1x1x1xf32>
    %56 = vector.extract %55[0, 0, 0] : f32 from vector<1x1x1xf32>
    %57 = vector.shape_cast %10 : vector<16x1xf32> to vector<1x16x1xf32>
    %cst_21 = arith.constant dense<0.000000e+00> : vector<1xf32>
    %58 = vector.multi_reduction <add>, %57, %cst_21 [1, 2] : vector<1x16x1xf32> to vector<1xf32>
    %59 = vector.shape_cast %58 : vector<1xf32> to vector<1x1x1xf32>
    %60 = vector.extract %59[0, 0, 0] : f32 from vector<1x1x1xf32>
    %61 = tpu.iota {dimensions = array<i32: 1>} : vector<8x128xi32>
    %c0_i32 = arith.constant 0 : i32
    %62 = vector.broadcast %c0_i32 : i32 to vector<8x128xi32>
    %63 = arith.cmpi eq, %61, %62 : vector<8x128xi32>
    %c1_i32 = arith.constant 1 : i32
    %64 = vector.broadcast %c1_i32 : i32 to vector<8x128xi32>
    %65 = arith.cmpi eq, %61, %64 : vector<8x128xi32>
    %c2_i32 = arith.constant 2 : i32
    %66 = vector.broadcast %c2_i32 : i32 to vector<8x128xi32>
    %67 = arith.cmpi eq, %61, %66 : vector<8x128xi32>
    %cst_22 = arith.constant 0.000000e+00 : f32
    %68 = vector.broadcast %60 : f32 to vector<8x128xf32>
    %69 = vector.broadcast %cst_22 : f32 to vector<8x128xf32>
    %70 = arith.select %67, %68, %69 : vector<8x128xi1>, vector<8x128xf32>
    %71 = vector.broadcast %56 : f32 to vector<8x128xf32>
    %72 = arith.select %65, %71, %70 : vector<8x128xi1>, vector<8x128xf32>
    %73 = vector.broadcast %33 : f32 to vector<8x128xf32>
    %74 = arith.select %63, %73, %72 : vector<8x128xi1>, vector<8x128xf32>
    %75 = vector.shape_cast %74 : vector<8x128xf32> to vector<1x8x128xf32>
    %c0_23 = arith.constant 0 : index
    %c0_24 = arith.constant 0 : index
    %c0_25 = arith.constant 0 : index
    %76 = vector.load %arg6[%c0_23, %c0_24, %c0_25] : memref<1x8x128xf32, #tpu.memory_space<vmem>>, vector<1x8x128xf32>
    tpu.vector_store %arg6[%c0_23, %c0_24, %c0_25], %75 {strides = array<i32>} : memref<1x8x128xf32, #tpu.memory_space<vmem>>, vector<1x8x128xf32>,
    return
  }
  func.func @transform_0(%arg0: i32) -> (i32, i32) {
    %c0_i32 = arith.constant 0 : i32
    %c0_i32_0 = arith.constant 0 : i32
    return %arg0, %c0_i32 : i32, i32
  }
  func.func @transform_1(%arg0: i32) -> (i32, i32) {
    %c0_i32 = arith.constant 0 : i32
    %c0_i32_0 = arith.constant 0 : i32
    %c0_i32_1 = arith.constant 0 : i32
    return %c0_i32, %c0_i32_0 : i32, i32
  }
  func.func @transform_2(%arg0: i32) -> (i32, i32) {
    %c0_i32 = arith.constant 0 : i32
    %c0_i32_0 = arith.constant 0 : i32
    %c0_i32_1 = arith.constant 0 : i32
    return %c0_i32, %c0_i32_0 : i32, i32
  }
  func.func @transform_3(%arg0: i32) -> (i32, i32) {
    %c0_i32 = arith.constant 0 : i32
    %c0_i32_0 = arith.constant 0 : i32
    return %arg0, %c0_i32 : i32, i32
  }
  func.func @transform_4(%arg0: i32) -> (i32, i32) {
    %c0_i32 = arith.constant 0 : i32
    %c0_i32_0 = arith.constant 0 : i32
    return %arg0, %c0_i32 : i32, i32
  }
  func.func @transform_5(%arg0: i32) -> (i32, i32, i32) {
    %c0_i32 = arith.constant 0 : i32
    %c0_i32_0 = arith.constant 0 : i32
    %c0_i32_1 = arith.constant 0 : i32
    return %arg0, %c0_i32, %c0_i32_0 : i32, i32, i32
  }
}

</mosaic_0001>

<llo_original>
// kernel: tpu_custom_call.1
$region0: #{tpu_custom_call.1}
  #allocation0 [shape = 'u32[]', space=smem, size = 0x4, offset = 0x4, fixed_abs, tag = 'smem constant byte address 0x4 - core index']
  #allocation1 [shape = 'u32[144,128]{1,0:T(1,128)}', space=vmem, size = 0x12000, scoped, tag = 'internal scratch']
  %s0 = inlined_call_operand.hbm [shape: bf16[16,768], index: 0, kind: input, shape index: {}]
  %s1 = inlined_call_operand.hbm [shape: bf16[768,128], index: 1, kind: input, shape index: {}]
  %s2 = inlined_call_operand.vmem [shape: f32[1,128], index: 2, kind: input, shape index: {}]
  %s3 = inlined_call_operand.vmem [shape: s32[16,8], index: 3, kind: input, shape index: {}]
  %s4 = inlined_call_operand.hbm [shape: f32[16,128], index: 4, kind: output, shape index: {0}]
  %s5 = inlined_call_operand.hbm [shape: f32[1,8,128], index: 5, kind: output, shape index: {1}]
  %6 = xla_tuple %s4, %s5
  %s7 = sld [smem:[#allocation0]]
  $region42: #{tpu_custom_call.1} parent=0
    _
  %s9 = ssub.s32 1, %s7
  %s10 = scalar_select 0, %s9, %s7
  $region1: #{tpu_custom_call.1} parent=0
    #allocation2 [shape = 'u8[24576]{0}', space=vmem, size = 0x6000, scoped, tag = 'input window, operand 0, single buffered']
    #allocation3 [shape = 's32[1]{0}', space=sflag, size = 0x4, scoped, tag = 'scoped memory for tpu_custom_call.1']
    #allocation4 [shape = 's32[1]{0}', space=sflag, size = 0x4, scoped, tag = 'scoped memory for tpu_custom_call.1']
    #allocation5 [shape = 'u8[196608]{0}', space=vmem, size = 0x30000, scoped, tag = 'input window, operand 1, single buffered']
    #allocation6 [shape = 's32[1]{0}', space=sflag, size = 0x4, scoped, tag = 'scoped memory for tpu_custom_call.1']
    #allocation7 [shape = 'u8[8192]{0}', space=vmem, size = 0x2000, scoped, tag = 'output window, operand 0, single buffered']
    #allocation8 [shape = 'u8[4096]{0}', space=vmem, size = 0x1000, scoped, tag = 'output window, operand 1, single buffered']
    #allocation9 [shape = 's32[1]{0}', space=sflag, size = 0x4, scoped, tag = 'scoped memory for tpu_custom_call.1']
    %11 = vsyncpa [#allocation3], 0
    %12 = vsyncpa [#allocation6], 0
    %13 = vsyncpa [#allocation4], 0
    %14 = vsyncpa [#allocation9], 0
    // Predicated region
    $region2: #{tpu_custom_call.1} parent=1 // pred_check
      _
    $region3: #{tpu_custom_call.1} parent=1 // pred_check_branch
      %16 = sbr.rel (0) target = $region5
    $region4: #{tpu_custom_call.1} parent=1 // pred_region
      %s18 = ssub.s32 768, 768
      %19 = vsyncadd [#allocation3], %s18
      %s20 = sshll.u32 [#allocation2], 4
      %s21 = int_to_ptr.vmem [resolvable:$true] %s20
      %26 = dma.hbm_to_vmem [thread:$0]  %s0, 768, %s21, [#allocation3], 384, 384, 24
    $region5: #{tpu_custom_call.1} parent=1 // pred_fallthru
      _
    // Predicated region
    $region6: #{tpu_custom_call.1} parent=1 // pred_check
      _
    $region7: #{tpu_custom_call.1} parent=1 // pred_check_branch
      %28 = sbr.rel (0) target = $region9
    $region8: #{tpu_custom_call.1} parent=1 // pred_region
      %s30 = ssub.s32 6144, 6144
      %31 = vsyncadd [#allocation6], %s30
      %s32 = sshll.u32 [#allocation5], 4
      %s33 = int_to_ptr.vmem [resolvable:$true] %s32
      %38 = dma.hbm_to_vmem [thread:$0]  %s1, 6144, %s33, [#allocation6], 64, 64, 4
    $region9: #{tpu_custom_call.1} parent=1 // pred_fallthru
      _
    // Predicated region
    $region10: #{tpu_custom_call.1} parent=1 // pred_check
      _
    $region11: #{tpu_custom_call.1} parent=1 // pred_check_branch
      %40 = sbr.rel (0) target = $region13
    $region12: #{tpu_custom_call.1} parent=1 // pred_region
      _
    $region13: #{tpu_custom_call.1} parent=1 // pred_fallthru
      _
    // Predicated region
    $region14: #{tpu_custom_call.1} parent=1 // pred_check
      _
    $region15: #{tpu_custom_call.1} parent=1 // pred_check_branch
      %42 = sbr.rel (0) target = $region17
    $region16: #{tpu_custom_call.1} parent=1 // pred_region
      _
    $region17: #{tpu_custom_call.1} parent=1 // pred_fallthru
      _
    // Predicated region
    $region18: #{tpu_custom_call.1} parent=1 // pred_check
      _
    $region19: #{tpu_custom_call.1} parent=1 // pred_check_branch
      %44 = sbr.rel (0) target = $region21
    $region20: #{tpu_custom_call.1} parent=1 // pred_region
      %45 = dma.done [#allocation3], 768
    $region21: #{tpu_custom_call.1} parent=1 // pred_fallthru
      _
    // Predicated region
    $region22: #{tpu_custom_call.1} parent=1 // pred_check
      _
    $region23: #{tpu_custom_call.1} parent=1 // pred_check_branch
      %47 = sbr.rel (0) target = $region25
    $region24: #{tpu_custom_call.1} parent=1 // pred_region
      %48 = dma.done [#allocation6], 6144
    $region25: #{tpu_custom_call.1} parent=1 // pred_fallthru
      _
    %v50 = vld [vmem:[#allocation2] sm:$0xff]
    %v51 = vld [vmem:[#allocation2 + $0x8] sm:$0xff]
    %v52 = vld [vmem:[#allocation2 + $0x10] sm:$0xff]
    %v53 = vld [vmem:[#allocation2 + $0x18] sm:$0xff]
    %v54 = vld [vmem:[#allocation2 + $0x20] sm:$0xff]
    %v55 = vld [vmem:[#allocation2 + $0x28] sm:$0xff]
    %v56 = vld [vmem:[#allocation5] sm:$0xf]
    %v57 = vld [vmem:[#allocation5 + $0x4] sm:$0xf]
    %v58 = vld [vmem:[#allocation5 + $0x8] sm:$0xf]
    %v59 = vld [vmem:[#allocation5 + $0xc] sm:$0xf]
    %v60 = vld [vmem:[#allocation5 + $0x10] sm:$0xf]
    %v61 = vld [vmem:[#allocation5 + $0x14] sm:$0xf]
    %v62 = vld [vmem:[#allocation5 + $0x18] sm:$0xf]
    %v63 = vld [vmem:[#allocation5 + $0x1c] sm:$0xf]
    %v64 = vld [vmem:[#allocation5 + $0x20] sm:$0xf]
    %v65 = vld [vmem:[#allocation5 + $0x24] sm:$0xf]
    %v66 = vld [vmem:[#allocation5 + $0x28] sm:$0xf]
    %v67 = vld [vmem:[#allocation5 + $0x2c] sm:$0xf]
    %v68 = vld [vmem:[#allocation5 + $0x30] sm:$0xf]
    %v69 = vld [vmem:[#allocation5 + $0x34] sm:$0xf]
    %v70 = vld [vmem:[#allocation5 + $0x38] sm:$0xf]
    %v71 = vld [vmem:[#allocation5 + $0x3c] sm:$0xf]
    %v72 = vld [vmem:[#allocation5 + $0x40] sm:$0xf]
    %v73 = vld [vmem:[#allocation5 + $0x44] sm:$0xf]
    %v74 = vld [vmem:[#allocation5 + $0x48] sm:$0xf]
    %v75 = vld [vmem:[#allocation5 + $0x4c] sm:$0xf]
    %v76 = vld [vmem:[#allocation5 + $0x50] sm:$0xf]
    %v77 = vld [vmem:[#allocation5 + $0x54] sm:$0xf]
    %v78 = vld [vmem:[#allocation5 + $0x58] sm:$0xf]
    %v79 = vld [vmem:[#allocation5 + $0x5c] sm:$0xf]
    %v80 = vld [vmem:[#allocation5 + $0x60] sm:$0xf]
    %v81 = vld [vmem:[#allocation5 + $0x64] sm:$0xf]
    %v82 = vld [vmem:[#allocation5 + $0x68] sm:$0xf]
    %v83 = vld [vmem:[#allocation5 + $0x6c] sm:$0xf]
    %v84 = vld [vmem:[#allocation5 + $0x70] sm:$0xf]
    %v85 = vld [vmem:[#allocation5 + $0x74] sm:$0xf]
    %v86 = vld [vmem:[#allocation5 + $0x78] sm:$0xf]
    %v87 = vld [vmem:[#allocation5 + $0x7c] sm:$0xf]
    %v88 = vld [vmem:[#allocation5 + $0x80] sm:$0xf]
    %v89 = vld [vmem:[#allocation5 + $0x84] sm:$0xf]
    %v90 = vld [vmem:[#allocation5 + $0x88] sm:$0xf]
    %v91 = vld [vmem:[#allocation5 + $0x8c] sm:$0xf]
    %v92 = vld [vmem:[#allocation5 + $0x90] sm:$0xf]
    %v93 = vld [vmem:[#allocation5 + $0x94] sm:$0xf]
    %v94 = vld [vmem:[#allocation5 + $0x98] sm:$0xf]
    %v95 = vld [vmem:[#allocation5 + $0x9c] sm:$0xf]
    %v96 = vld [vmem:[#allocation5 + $0xa0] sm:$0xf]
    %v97 = vld [vmem:[#allocation5 + $0xa4] sm:$0xf]
    %v98 = vld [vmem:[#allocation5 + $0xa8] sm:$0xf]
    %v99 = vld [vmem:[#allocation5 + $0xac] sm:$0xf]
    %v100 = vld [vmem:[#allocation5 + $0xb0] sm:$0xf]
    %v101 = vld [vmem:[#allocation5 + $0xb4] sm:$0xf]
    %v102 = vld [vmem:[#allocation5 + $0xb8] sm:$0xf]
    %v103 = vld [vmem:[#allocation5 + $0xbc] sm:$0xf]
    %v104 = vld [vmem:[#allocation5 + $0xc0] sm:$0xf]
    %v105 = vld [vmem:[#allocation5 + $0xc4] sm:$0xf]
    %v106 = vld [vmem:[#allocation5 + $0xc8] sm:$0xf]
    %v107 = vld [vmem:[#allocation5 + $0xcc] sm:$0xf]
    %v108 = vld [vmem:[#allocation5 + $0xd0] sm:$0xf]
    %v109 = vld [vmem:[#allocation5 + $0xd4] sm:$0xf]
    %v110 = vld [vmem:[#allocation5 + $0xd8] sm:$0xf]
    %v111 = vld [vmem:[#allocation5 + $0xdc] sm:$0xf]
    %v112 = vld [vmem:[#allocation5 + $0xe0] sm:$0xf]
    %v113 = vld [vmem:[#allocation5 + $0xe4] sm:$0xf]
    %v114 = vld [vmem:[#allocation5 + $0xe8] sm:$0xf]
    %v115 = vld [vmem:[#allocation5 + $0xec] sm:$0xf]
    %v116 = vld [vmem:[#allocation5 + $0xf0] sm:$0xf]
    %v117 = vld [vmem:[#allocation5 + $0xf4] sm:$0xf]
    %v118 = vld [vmem:[#allocation5 + $0xf8] sm:$0xf]
    %v119 = vld [vmem:[#allocation5 + $0xfc] sm:$0xf]
    %v120 = vld [vmem:[#allocation5 + $0x100] sm:$0xf]
    %v121 = vld [vmem:[#allocation5 + $0x104] sm:$0xf]
    %v122 = vld [vmem:[#allocation5 + $0x108] sm:$0xf]
    %v123 = vld [vmem:[#allocation5 + $0x10c] sm:$0xf]
    %v124 = vld [vmem:[#allocation5 + $0x110] sm:$0xf]
    %v125 = vld [vmem:[#allocation5 + $0x114] sm:$0xf]
    %v126 = vld [vmem:[#allocation5 + $0x118] sm:$0xf]
    %v127 = vld [vmem:[#allocation5 + $0x11c] sm:$0xf]
    %v128 = vld [vmem:[#allocation5 + $0x120] sm:$0xf]
    %v129 = vld [vmem:[#allocation5 + $0x124] sm:$0xf]
    %v130 = vld [vmem:[#allocation5 + $0x128] sm:$0xf]
    %v131 = vld [vmem:[#allocation5 + $0x12c] sm:$0xf]
    %v132 = vld [vmem:[#allocation5 + $0x130] sm:$0xf]
    %v133 = vld [vmem:[#allocation5 + $0x134] sm:$0xf]
    %v134 = vld [vmem:[#allocation5 + $0x138] sm:$0xf]
    %v135 = vld [vmem:[#allocation5 + $0x13c] sm:$0xf]
    %v136 = vld [vmem:[#allocation5 + $0x140] sm:$0xf]
    %v137 = vld [vmem:[#allocation5 + $0x144] sm:$0xf]
    %v138 = vld [vmem:[#allocation5 + $0x148] sm:$0xf]
    %v139 = vld [vmem:[#allocation5 + $0x14c] sm:$0xf]
    %v140 = vld [vmem:[#allocation5 + $0x150] sm:$0xf]
    %v141 = vld [vmem:[#allocation5 + $0x154] sm:$0xf]
    %v142 = vld [vmem:[#allocation5 + $0x158] sm:$0xf]
    %v143 = vld [vmem:[#allocation5 + $0x15c] sm:$0xf]
    %v144 = vld [vmem:[#allocation5 + $0x160] sm:$0xf]
    %v145 = vld [vmem:[#allocation5 + $0x164] sm:$0xf]
    %v146 = vld [vmem:[#allocation5 + $0x168] sm:$0xf]
    %v147 = vld [vmem:[#allocation5 + $0x16c] sm:$0xf]
    %v148 = vld [vmem:[#allocation5 + $0x170] sm:$0xf]
    %v149 = vld [vmem:[#allocation5 + $0x174] sm:$0xf]
    %v150 = vld [vmem:[#allocation5 + $0x178] sm:$0xf]
    %v151 = vld [vmem:[#allocation5 + $0x17c] sm:$0xf]
    %v152 = vld [vmem:[%s2] sm:$0x1]
    %v154 = vlaneseq
    %v155 = vshrl.u32 %v154, 7
    %v156 = vsub.s32 0, %v155
    %v157 = vrot.slane %v152, %v156
    %v165 = vunpack.c.l.b16 %v50
    %v166 = vunpack.c.h.b16 %v50
    %v167 = vunpack.c.l.b16 %v51
    %v168 = vunpack.c.h.b16 %v51
    %v169 = vunpack.c.l.b16 %v52
    %v170 = vunpack.c.h.b16 %v52
    %v171 = vunpack.c.l.b16 %v53
    %v172 = vunpack.c.h.b16 %v53
    %v173 = vunpack.c.l.b16 %v54
    %v174 = vunpack.c.h.b16 %v54
    %v175 = vunpack.c.l.b16 %v55
    %v176 = vunpack.c.h.b16 %v55
    %v177 = vpack.c.b16 %v171, %v165
    %v178 = vpack.c.b16 %v172, %v166
    %v179 = vpack.c.b16 %v173, %v167
    %v180 = vpack.c.b16 %v174, %v168
    %v181 = vpack.c.b16 %v175, %v169
    %v182 = vpack.c.b16 %v176, %v170
    %v285 = vunpack.c.l.b16 %v56
    %v286 = vunpack.c.l.b16 %v57
    %v287 = vunpack.c.l.b16 %v58
    %v288 = vunpack.c.l.b16 %v59
    %v289 = vunpack.c.l.b16 %v60
    %v290 = vunpack.c.l.b16 %v61
    %v291 = vunpack.c.l.b16 %v62
    %v292 = vunpack.c.l.b16 %v63
    %v293 = vunpack.c.l.b16 %v64
    %v294 = vunpack.c.l.b16 %v65
    %v295 = vunpack.c.l.b16 %v66
    %v296 = vunpack.c.l.b16 %v67
    %v297 = vunpack.c.l.b16 %v68
    %v298 = vunpack.c.l.b16 %v69
    %v299 = vunpack.c.l.b16 %v70
    %v300 = vunpack.c.l.b16 %v71
    %v301 = vunpack.c.l.b16 %v72
    %v302 = vunpack.c.l.b16 %v73
    %v303 = vunpack.c.l.b16 %v74
    %v304 = vunpack.c.l.b16 %v75
    %v305 = vunpack.c.l.b16 %v76
    %v306 = vunpack.c.l.b16 %v77
    %v307 = vunpack.c.l.b16 %v78
    %v308 = vunpack.c.l.b16 %v79
    %v309 = vunpack.c.l.b16 %v80
    %v310 = vunpack.c.l.b16 %v81
    %v311 = vunpack.c.l.b16 %v82
    %v312 = vunpack.c.l.b16 %v83
    %v313 = vunpack.c.l.b16 %v84
    %v314 = vunpack.c.l.b16 %v85
    %v315 = vunpack.c.l.b16 %v86
    %v316 = vunpack.c.l.b16 %v87
    %v317 = vunpack.c.l.b16 %v88
    %v318 = vunpack.c.l.b16 %v89
    %v319 = vunpack.c.l.b16 %v90
    %v320 = vunpack.c.l.b16 %v91
    %v321 = vunpack.c.l.b16 %v92
    %v322 = vunpack.c.l.b16 %v93
    %v323 = vunpack.c.l.b16 %v94
    %v324 = vunpack.c.l.b16 %v95
    %v325 = vunpack.c.l.b16 %v96
    %v326 = vunpack.c.l.b16 %v97
    %v327 = vunpack.c.l.b16 %v98
    %v328 = vunpack.c.l.b16 %v99
    %v329 = vunpack.c.l.b16 %v100
    %v330 = vunpack.c.l.b16 %v101
    %v331 = vunpack.c.l.b16 %v102
    %v332 = vunpack.c.l.b16 %v103
    %v333 = vunpack.c.l.b16 %v104
    %v334 = vunpack.c.l.b16 %v105
    %v335 = vunpack.c.l.b16 %v106
    %v336 = vunpack.c.l.b16 %v107
    %v337 = vunpack.c.l.b16 %v108
    %v338 = vunpack.c.l.b16 %v109
    %v339 = vunpack.c.l.b16 %v110
    %v340 = vunpack.c.l.b16 %v111
    %v341 = vunpack.c.l.b16 %v112
    %v342 = vunpack.c.l.b16 %v113
    %v343 = vunpack.c.l.b16 %v114
    %v344 = vunpack.c.l.b16 %v115
    %v345 = vunpack.c.l.b16 %v116
    %v346 = vunpack.c.l.b16 %v117
    %v347 = vunpack.c.l.b16 %v118
    %v348 = vunpack.c.l.b16 %v119
    %v349 = vunpack.c.l.b16 %v120
    %v350 = vunpack.c.l.b16 %v121
    %v351 = vunpack.c.l.b16 %v122
    %v352 = vunpack.c.l.b16 %v123
    %v353 = vunpack.c.l.b16 %v124
    %v354 = vunpack.c.l.b16 %v125
    %v355 = vunpack.c.l.b16 %v126
    %v356 = vunpack.c.l.b16 %v127
    %v357 = vunpack.c.l.b16 %v128
    %v358 = vunpack.c.l.b16 %v129
    %v359 = vunpack.c.l.b16 %v130
    %v360 = vunpack.c.l.b16 %v131
    %v361 = vunpack.c.l.b16 %v132
    %v362 = vunpack.c.l.b16 %v133
    %v363 = vunpack.c.l.b16 %v134
    %v364 = vunpack.c.l.b16 %v135
    %v365 = vunpack.c.l.b16 %v136
    %v366 = vunpack.c.l.b16 %v137
    %v367 = vunpack.c.l.b16 %v138
    %v368 = vunpack.c.l.b16 %v139
    %v369 = vunpack.c.l.b16 %v140
    %v370 = vunpack.c.l.b16 %v141
    %v371 = vunpack.c.l.b16 %v142
    %v372 = vunpack.c.l.b16 %v143
    %v373 = vunpack.c.l.b16 %v144
    %v374 = vunpack.c.l.b16 %v145
    %v375 = vunpack.c.l.b16 %v146
    %v376 = vunpack.c.l.b16 %v147
    %v377 = vunpack.c.l.b16 %v148
    %v378 = vunpack.c.l.b16 %v149
    %v379 = vunpack.c.l.b16 %v150
    %v380 = vunpack.c.l.b16 %v151
    %v381 = vpack.c.b16 %v286, %v285
    %v382 = vpack.c.b16 %v288, %v287
    %v383 = vpack.c.b16 %v290, %v289
    %v384 = vpack.c.b16 %v292, %v291
    %v385 = vpack.c.b16 %v294, %v293
    %v386 = vpack.c.b16 %v296, %v295
    %v387 = vpack.c.b16 %v298, %v297
    %v388 = vpack.c.b16 %v300, %v299
    %v389 = vpack.c.b16 %v302, %v301
    %v390 = vpack.c.b16 %v304, %v303
    %v391 = vpack.c.b16 %v306, %v305
    %v392 = vpack.c.b16 %v308, %v307
    %v393 = vpack.c.b16 %v310, %v309
    %v394 = vpack.c.b16 %v312, %v311
    %v395 = vpack.c.b16 %v314, %v313
    %v396 = vpack.c.b16 %v316, %v315
    %v397 = vpack.c.b16 %v318, %v317
    %v398 = vpack.c.b16 %v320, %v319
    %v399 = vpack.c.b16 %v322, %v321
    %v400 = vpack.c.b16 %v324, %v323
    %v401 = vpack.c.b16 %v326, %v325
    %v402 = vpack.c.b16 %v328, %v327
    %v403 = vpack.c.b16 %v330, %v329
    %v404 = vpack.c.b16 %v332, %v331
    %v405 = vpack.c.b16 %v334, %v333
    %v406 = vpack.c.b16 %v336, %v335
    %v407 = vpack.c.b16 %v338, %v337
    %v408 = vpack.c.b16 %v340, %v339
    %v409 = vpack.c.b16 %v342, %v341
    %v410 = vpack.c.b16 %v344, %v343
    %v411 = vpack.c.b16 %v346, %v345
    %v412 = vpack.c.b16 %v348, %v347
    %v413 = vpack.c.b16 %v350, %v349
    %v414 = vpack.c.b16 %v352, %v351
    %v415 = vpack.c.b16 %v354, %v353
    %v416 = vpack.c.b16 %v356, %v355
    %v417 = vpack.c.b16 %v358, %v357
    %v418 = vpack.c.b16 %v360, %v359
    %v419 = vpack.c.b16 %v362, %v361
    %v420 = vpack.c.b16 %v364, %v363
    %v421 = vpack.c.b16 %v366, %v365
    %v422 = vpack.c.b16 %v368, %v367
    %v423 = vpack.c.b16 %v370, %v369
    %v424 = vpack.c.b16 %v372, %v371
    %v425 = vpack.c.b16 %v374, %v373
    %v426 = vpack.c.b16 %v376, %v375
    %v427 = vpack.c.b16 %v378, %v377
    %v428 = vpack.c.b16 %v380, %v379
    %477 = vmatprep.subr.bf16.mxu0 0
    %478 = vmatpush1.bf16.msra.mxu0 %v388
    %479 = vmatprep.subr.bf16.mxu0 0
    %480 = vmatpush1.bf16.msra.mxu0 %v387
    %481 = vmatprep.subr.bf16.mxu0 0
    %482 = vmatpush1.bf16.msra.mxu0 %v386
    %483 = vmatprep.subr.bf16.mxu0 0
    %484 = vmatpush1.bf16.msra.mxu0 %v385
    %485 = vmatprep.subr.bf16.mxu0 0
    %486 = vmatpush1.bf16.msra.mxu0 %v384
    %487 = vmatprep.subr.bf16.mxu0 0
    %488 = vmatpush1.bf16.msra.mxu0 %v383
    %489 = vmatprep.subr.bf16.mxu0 0
    %490 = vmatpush1.bf16.msra.mxu0 %v382
    %491 = vmatprep.subr.bf16.mxu0 0
    %492 = vmatpush1.bf16.msra.mxu0 %v381
    %493 = vmatprep.subr.bf16.mxu0 0
    %494 = vmatpush2.bf16.msra.mxu0 %v396
    %495 = vmatprep.subr.bf16.mxu0 0
    %496 = vmatpush2.bf16.msra.mxu0 %v395
    %497 = vmatprep.subr.bf16.mxu0 0
    %498 = vmatpush2.bf16.msra.mxu0 %v394
    %499 = vmatprep.subr.bf16.mxu0 0
    %500 = vmatpush2.bf16.msra.mxu0 %v393
    %501 = vmatprep.subr.bf16.mxu0 0
    %502 = vmatpush2.bf16.msra.mxu0 %v392
    %503 = vmatprep.subr.bf16.mxu0 0
    %504 = vmatpush2.bf16.msra.mxu0 %v391
    %505 = vmatprep.subr.bf16.mxu0 0
    %506 = vmatpush2.bf16.msra.mxu0 %v390
    %507 = vmatprep.subr.bf16.mxu0 0
    %508 = vmatpush2.bf16.msra.mxu0 %v389
    %509 = vmatprep.mubr.bf16.mxu0 %v178
    %510 = vmatmul.mubr.bf16.gmra.mxu0 %v177
    %v511 = vpop.f32.mrf.mxu0
    %v512 = vadd.f32 %v157, %v511
    %v513 = vpop.f32.mrf.mxu0
    %v514 = vpop.f32.mrf.mxu0
    %v515 = vadd.f32 %v157, %v514
    %v516 = vpop.f32.mrf.mxu0
    %517 = vdwg.mxu0
    %518 = vmatprep.subr.bf16.mxu0 0
    %519 = vmatpush1.bf16.msra.mxu0 %v404
    %520 = vmatprep.subr.bf16.mxu0 0
    %521 = vmatpush1.bf16.msra.mxu0 %v403
    %522 = vmatprep.subr.bf16.mxu0 0
    %523 = vmatpush1.bf16.msra.mxu0 %v402
    %524 = vmatprep.subr.bf16.mxu0 0
    %525 = vmatpush1.bf16.msra.mxu0 %v401
    %526 = vmatprep.subr.bf16.mxu0 0
    %527 = vmatpush1.bf16.msra.mxu0 %v400
    %528 = vmatprep.subr.bf16.mxu0 0
    %529 = vmatpush1.bf16.msra.mxu0 %v399
    %530 = vmatprep.subr.bf16.mxu0 0
    %531 = vmatpush1.bf16.msra.mxu0 %v398
    %532 = vmatprep.subr.bf16.mxu0 0
    %533 = vmatpush1.bf16.msra.mxu0 %v397
    %534 = vmatprep.subr.bf16.mxu0 0
    %535 = vmatpush2.bf16.msra.mxu0 %v412
    %536 = vmatprep.subr.bf16.mxu0 0
    %537 = vmatpush2.bf16.msra.mxu0 %v411
    %538 = vmatprep.subr.bf16.mxu0 0
    %539 = vmatpush2.bf16.msra.mxu0 %v410
    %540 = vmatprep.subr.bf16.mxu0 0
    %541 = vmatpush2.bf16.msra.mxu0 %v409
    %542 = vmatprep.subr.bf16.mxu0 0
    %543 = vmatpush2.bf16.msra.mxu0 %v408
    %544 = vmatprep.subr.bf16.mxu0 0
    %545 = vmatpush2.bf16.msra.mxu0 %v407
    %546 = vmatprep.subr.bf16.mxu0 0
    %547 = vmatpush2.bf16.msra.mxu0 %v406
    %548 = vmatprep.subr.bf16.mxu0 0
    %549 = vmatpush2.bf16.msra.mxu0 %v405
    %550 = vmatprep.mubr.bf16.mxu0 %v180
    %551 = vmatmul.mubr.bf16.gmra.mxu0 %v179
    %v552 = vpop.f32.mrf.mxu0
    %v553 = vadd.f32 %v512, %v552
    %v554 = vpop.f32.mrf.mxu0
    %v555 = vpop.f32.mrf.mxu0
    %v556 = vadd.f32 %v515, %v555
    %v557 = vpop.f32.mrf.mxu0
    %558 = vdwg.mxu0
    %559 = vmatprep.subr.bf16.mxu0 0
    %560 = vmatpush1.bf16.msra.mxu0 %v420
    %561 = vmatprep.subr.bf16.mxu0 0
    %562 = vmatpush1.bf16.msra.mxu0 %v419
    %563 = vmatprep.subr.bf16.mxu0 0
    %564 = vmatpush1.bf16.msra.mxu0 %v418
    %565 = vmatprep.subr.bf16.mxu0 0
    %566 = vmatpush1.bf16.msra.mxu0 %v417
    %567 = vmatprep.subr.bf16.mxu0 0
    %568 = vmatpush1.bf16.msra.mxu0 %v416
    %569 = vmatprep.subr.bf16.mxu0 0
    %570 = vmatpush1.bf16.msra.mxu0 %v415
    %571 = vmatprep.subr.bf16.mxu0 0
    %572 = vmatpush1.bf16.msra.mxu0 %v414
    %573 = vmatprep.subr.bf16.mxu0 0
    %574 = vmatpush1.bf16.msra.mxu0 %v413
    %575 = vmatprep.subr.bf16.mxu0 0
    %576 = vmatpush2.bf16.msra.mxu0 %v428
    %577 = vmatprep.subr.bf16.mxu0 0
    %578 = vmatpush2.bf16.msra.mxu0 %v427
    %579 = vmatprep.subr.bf16.mxu0 0
    %580 = vmatpush2.bf16.msra.mxu0 %v426
    %581 = vmatprep.subr.bf16.mxu0 0
    %582 = vmatpush2.bf16.msra.mxu0 %v425
    %583 = vmatprep.subr.bf16.mxu0 0
    %584 = vmatpush2.bf16.msra.mxu0 %v424
    %585 = vmatprep.subr.bf16.mxu0 0
    %586 = vmatpush2.bf16.msra.mxu0 %v423
    %587 = vmatprep.subr.bf16.mxu0 0
    %588 = vmatpush2.bf16.msra.mxu0 %v422
    %589 = vmatprep.subr.bf16.mxu0 0
    %590 = vmatpush2.bf16.msra.mxu0 %v421
    %591 = vmatprep.mubr.bf16.mxu0 %v182
    %592 = vmatmul.mubr.bf16.gmra.mxu0 %v181
    %v593 = vpop.f32.mrf.mxu0
    %v594 = vadd.f32 %v553, %v593
    %v595 = vpop.f32.mrf.mxu0
    %v596 = vpop.f32.mrf.mxu0
    %v597 = vadd.f32 %v556, %v596
    %v598 = vpop.f32.mrf.mxu0
    %599 = vdwg.mxu0
    %600 = vst [vmem:[#allocation7] sm:$0xff] %v594
    %601 = vst [vmem:[#allocation7 + $0x8] sm:$0xff] %v597
    %v602 = vld [vmem:[%s3] sm:$0xff]
    %v603 = vld [vmem:[%s3 + $0x8] sm:$0xff]
    %v604 = vcvt.s32.f32 %v602
    %v605 = vcvt.s32.f32 %v603
    %vm606 = vcmask 138240
    %v607 = vsel %vm606, %v594, -inf
    %608 = vmax.xlane.f32.xlu0 %v607
    %v609 = vpop.xlane.xlu0 %608
    %v610 = vsel %vm606, %v597, -inf
    %611 = vmax.xlane.f32.xlu0 %v610
    %v612 = vpop.xlane.xlu0 %611
    %v613 = vsub.f32 %v594, %v609
    %v614 = vsub.f32 %v597, %v612
    %v615 = vmul.f32 %v613, 1.442695
    %v616 = vpow.pop %v615
    %v617 = vmul.f32 %v614, 1.442695
    %v618 = vpow.pop %v617
    %v619 = vsel %vm606, %v616, 0.0
    %620 = vadd.xlane.f32.xlu0 %v619
    %v621 = vpop.xlane.xlu0 %620
    %v622 = vsel %vm606, %v618, 0.0
    %623 = vadd.xlane.f32.xlu0 %v622
    %v624 = vpop.xlane.xlu0 %623
    %v625 = vlog2.pop %v621
    %v626 = vmul.f32 %v625, 0.6931472
    %v627 = vlog2.pop %v624
    %v628 = vmul.f32 %v627, 0.6931472
    %v629 = vadd.f32 %v626, %v609
    %v630 = vadd.f32 %v628, %v612
    %v631 = vlaneseq
    %v632 = vand.u32 %v631, 127
    %633 = vset.pattern.permute.xlu0 0
    %634 = vperm.xlu0 %633, %v602
    %v635 = vpop.permute.xlu0 %634
    %636 = vset.pattern.permute.xlu0 0
    %637 = vperm.xlu0 %636, %v603
    %v638 = vpop.permute.xlu0 %637
    %vm639 = vcmp.eq.s32.totalorder %v632, %v635
    %vm640 = vcmp.eq.s32.totalorder %v632, %v638
    %v641 = vsel %vm639, %v594, 0.0
    %v642 = vsel %vm640, %v597, 0.0
    %v643 = vsel %vm606, %v641, 0.0
    %644 = vadd.xlane.f32.xlu0 %v643
    %v645 = vpop.xlane.xlu0 %644
    %v646 = vsel %vm606, %v642, 0.0
    %647 = vadd.xlane.f32.xlu0 %v646
    %v648 = vpop.xlane.xlu0 %647
    %v649 = vsub.f32 %v629, %v645
    %v650 = vsub.f32 %v630, %v648
    %v651 = vmul.f32 %v649, %v604
    %v652 = vmul.f32 %v650, %v605
    %655 = vrot.lane.b32.xlu0 %v651, 126
    %v656 = vpop.permute.xlu0 %655
    %657 = vrot.lane.b32.xlu0 %v652, 126
    %v658 = vpop.permute.xlu0 %657
    %vm661 = vcmask 7168
    %v662 = vsel %vm661, %v656, 0.0
    %v663 = vsel %vm661, %v658, 0.0
    %v664 = vadd.f32 %v662, %v663
    %665 = vadd.xlane.f32.xlu0 %v664
    %v666 = vpop.xlane.xlu0 %665
    %v667 = vrot.slane %v666, 4
    %v668 = vadd.f32 %v666, %v667
    %v669 = vrot.slane %v668, 2
    %v670 = vadd.f32 %v668, %v669
    %v671 = vrot.slane %v670, 1
    %v672 = vadd.f32 %v670, %v671
    %s673 = vtos %v672
    %vm674 = vcmask 212104
    %v675 = vsel %vm674, %v594, -inf
    %676 = vmax.xlane.f32.xlu0 %v675
    %v677 = vpop.xlane.xlu0 %676
    %v678 = vsel %vm674, %v597, -inf
    %679 = vmax.xlane.f32.xlu0 %v678
    %v680 = vpop.xlane.xlu0 %679
    %v681 = vsub.f32 %v594, %v677
    %v682 = vsub.f32 %v597, %v680
    %v683 = vmul.f32 %v681, 1.442695
    %v684 = vpow.pop %v683
    %v685 = vmul.f32 %v682, 1.442695
    %v686 = vpow.pop %v685
    %689 = vrot.lane.b32.xlu0 %v684, 111
    %v690 = vpop.permute.xlu0 %689
    %691 = vrot.lane.b32.xlu0 %v686, 111
    %v692 = vpop.permute.xlu0 %691
    %vm695 = vcmask 72704
    %v696 = vsel %vm695, %v690, 0.0
    %697 = vadd.xlane.f32.xlu0 %v696
    %v698 = vpop.xlane.xlu0 %697
    %v699 = vsel %vm695, %v692, 0.0
    %700 = vadd.xlane.f32.xlu0 %v699
    %v701 = vpop.xlane.xlu0 %700
    %v702 = vlog2.pop %v698
    %v703 = vmul.f32 %v702, 0.6931472
    %v704 = vlog2.pop %v701
    %v705 = vmul.f32 %v704, 0.6931472
    %v706 = vadd.f32 %v703, %v677
    %v707 = vadd.f32 %v705, %v680
    %708 = vset.pattern.permute.xlu0 1
    %709 = vperm.xlu0 %708, %v602
    %v710 = vpop.permute.xlu0 %709
    %711 = vset.pattern.permute.xlu0 1
    %712 = vperm.xlu0 %711, %v603
    %v713 = vpop.permute.xlu0 %712
    %vm714 = vcmp.eq.s32.totalorder %v632, %v710
    %vm715 = vcmp.eq.s32.totalorder %v632, %v713
    %718 = vrot.lane.b32.xlu0 %v594, 111
    %v719 = vpop.permute.xlu0 %718
    %720 = vrot.lane.b32.xlu0 %v597, 111
    %v721 = vpop.permute.xlu0 %720
    %v724 = vsel %vm714, %v719, 0.0
    %v725 = vsel %vm715, %v721, 0.0
    %v726 = vsel %vm695, %v724, 0.0
    %727 = vadd.xlane.f32.xlu0 %v726
    %v728 = vpop.xlane.xlu0 %727
    %v729 = vsel %vm695, %v725, 0.0
    %730 = vadd.xlane.f32.xlu0 %v729
    %v731 = vpop.xlane.xlu0 %730
    %v732 = vsub.f32 %v706, %v728
    %v733 = vsub.f32 %v707, %v731
    %v734 = vmul.f32 %v732, %v604
    %v735 = vmul.f32 %v733, %v605
    %738 = vrot.lane.b32.xlu0 %v734, 126
    %v739 = vpop.permute.xlu0 %738
    %740 = vrot.lane.b32.xlu0 %v735, 126
    %v741 = vpop.permute.xlu0 %740
    %v744 = vsel %vm661, %v739, 0.0
    %v745 = vsel %vm661, %v741, 0.0
    %v746 = vadd.f32 %v744, %v745
    %747 = vadd.xlane.f32.xlu0 %v746
    %v748 = vpop.xlane.xlu0 %747
    %v749 = vrot.slane %v748, 4
    %v750 = vadd.f32 %v748, %v749
    %v751 = vrot.slane %v750, 2
    %v752 = vadd.f32 %v750, %v751
    %v753 = vrot.slane %v752, 1
    %v754 = vadd.f32 %v752, %v753
    %s755 = vtos %v754
    %758 = vrot.lane.b32.xlu0 %v604, 126
    %v759 = vpop.permute.xlu0 %758
    %760 = vrot.lane.b32.xlu0 %v605, 126
    %v761 = vpop.permute.xlu0 %760
    %v764 = vsel %vm661, %v759, 0.0
    %v765 = vsel %vm661, %v761, 0.0
    %v766 = vadd.f32 %v764, %v765
    %767 = vadd.xlane.f32.xlu0 %v766
    %v768 = vpop.xlane.xlu0 %767
    %v769 = vrot.slane %v768, 4
    %v770 = vadd.f32 %v768, %v769
    %v771 = vrot.slane %v770, 2
    %v772 = vadd.f32 %v770, %v771
    %v773 = vrot.slane %v772, 1
    %v774 = vadd.f32 %v772, %v773
    %s775 = vtos %v774
    %vm776 = vcmp.eq.s32.totalorder %v632, 0
    %vm777 = vcmp.eq.s32.totalorder %v632, 1
    %vm778 = vcmp.eq.s32.totalorder %v632, 2
    %v779 = vstv %s775
    %v780 = vsel %vm778, %v779, 0.0
    %v781 = vstv %s755
    %v782 = vsel %vm777, %v781, %v780
    %v783 = vstv %s673
    %v784 = vsel %vm776, %v783, %v782
    %785 = vst [vmem:[#allocation8] sm:$0xff] %v784
    // Predicated region
    $region26: #{tpu_custom_call.1} parent=1 // pred_check
      _
    $region27: #{tpu_custom_call.1} parent=1 // pred_check_branch
      %787 = sbr.rel (0) target = $region29
    $region28: #{tpu_custom_call.1} parent=1 // pred_region
      %s789 = ssub.s32 256, 256
      %790 = vsyncadd [#allocation4], %s789
      %s791 = sshll.u32 [#allocation7], 4
      %s792 = int_to_ptr.vmem [resolvable:$true] %s791
      %797 = dma.vmem_to_hbm [thread:$0]  %s792, 256, %s4, [#allocation4], 128, 128, 8
    $region29: #{tpu_custom_call.1} parent=1 // pred_fallthru
      _
    // Predicated region
    $region30: #{tpu_custom_call.1} parent=1 // pred_check
      _
    $region31: #{tpu_custom_call.1} parent=1 // pred_check_branch
      %799 = sbr.rel (0) target = $region33
    $region32: #{tpu_custom_call.1} parent=1 // pred_region
      %s801 = ssub.s32 128, 128
      %802 = vsyncadd [#allocation9], %s801
      %s804 = sshll.u32 [#allocation8], 4
      %s805 = int_to_ptr.vmem [resolvable:$true] %s804
      %807 = dma.vmem_to_hbm [thread:$0]  %s805, 128, %s5, [#allocation9]
    $region33: #{tpu_custom_call.1} parent=1 // pred_fallthru
      _
    // Predicated region
    $region34: #{tpu_custom_call.1} parent=1 // pred_check
      _
    $region35: #{tpu_custom_call.1} parent=1 // pred_check_branch
      %809 = sbr.rel (0) target = $region37
    $region36: #{tpu_custom_call.1} parent=1 // pred_region
      %810 = dma.done [#allocation4], 256
    $region37: #{tpu_custom_call.1} parent=1 // pred_fallthru
      _
    // Predicated region
    $region38: #{tpu_custom_call.1} parent=1 // pred_check
      _
    $region39: #{tpu_custom_call.1} parent=1 // pred_check_branch
      %812 = sbr.rel (0) target = $region41
    $region40: #{tpu_custom_call.1} parent=1 // pred_region
      %813 = dma.done [#allocation9], 128
    $region41: #{tpu_custom_call.1} parent=1 // pred_fallthru
      _
    %814 = vsyncpa [#allocation3], 1
    %815 = vsyncpa [#allocation6], 1
    %816 = vsyncpa [#allocation4], 1
    %817 = vsyncpa [#allocation9], 1

</llo_original>
